<compile_context>
chip_gen: v5e
topology: v5e:2x2
jax: 0.10.0
libtpu: 0.0.40
codegen_flags: <defaults>
</compile_context>

<pallas_src>
import functools

import jax
import jax.numpy as jnp
from jax.experimental import pallas as pl
from jax.experimental.pallas import tpu as pltpu


def _round_up(v, m):
    return ((v + m - 1) // m) * m


def _choose_block_rows(n_rows, n_cols, f_out, itemsize, budget_bytes=20 * 1024 * 1024):
    """Largest row tile (multiple of 8, <=512) whose double-buffered adj + out
    blocks stay within a conservative VMEM budget (safe on v5e/v6e/v7x)."""
    tm = 8
    for cand in (16, 32, 64, 128, 256, 512):
        need = 2 * cand * n_cols * itemsize + 2 * cand * f_out * 4
        if need <= budget_bytes:
            tm = cand
    return min(tm, _round_up(n_rows, 8))


def _gcn_kernel(*refs, apply_weight, use_layer_norm, activation, eps):
    if apply_weight:
        adj_ref, m_ref, w_ref, b_ref, g_ref, be_ref, o_ref = refs
    else:
        adj_ref, m_ref, b_ref, g_ref, be_ref, o_ref = refs
        w_ref = None

    # Row tile of the N x N contraction on the MXU, f32 accumulate.
    # m_ref is either the raw features x (weight applied after, cheaper when
    # F_in <= F_out) or the pre-transformed features x @ W (when F_out < F_in).
    agg = jnp.dot(adj_ref[...], m_ref[...], preferred_element_type=jnp.float32)
    if apply_weight:
        h = jnp.dot(agg.astype(m_ref.dtype), w_ref[...],
                    preferred_element_type=jnp.float32)
    else:
        h = agg

    h = h + b_ref[...].astype(jnp.float32)

    if use_layer_norm:
        # LayerNorm over the (un-padded, full-width) feature axis, f32 math.
        mean = jnp.mean(h, axis=-1, keepdims=True)
        centered = h - mean
        var = jnp.mean(centered * centered, axis=-1, keepdims=True)
        h = centered * jax.lax.rsqrt(var + eps)
        h = h * g_ref[...].astype(jnp.float32) + be_ref[...].astype(jnp.float32)

    if activation == "relu":
        h = jnp.maximum(h, 0.0)
    elif activation == "tanh":
        h = jnp.tanh(h)
    elif callable(activation):
        h = activation(h)
    # activation is None -> identity

    o_ref[...] = h.astype(o_ref.dtype)


def gcn_forward(adj, x, weight, bias, gamma=None, beta=None,
                activation=None, layer_norm=False, eps=1e-5,
                mxu_dtype=None, block_rows=None):
    """Pallas GCN forward.  adj: [N, N], x: [N, F_in], weight: [F_in, F_out]."""
    n, f_in = x.shape
    f_out = weight.shape[1]
    assert adj.shape == (n, n)
    assert weight.shape == (f_in, f_out)
    assert bias.shape == (f_out,)

    out_dtype = x.dtype
    compute_dtype = jnp.dtype(mxu_dtype) if mxu_dtype is not None else jnp.dtype(x.dtype)
    itemsize = compute_dtype.itemsize

    # ---- Choose the cheaper matmul association at trace time. ------------------
    apply_weight = f_in <= f_out
    if apply_weight:
        # Kernel does (adj_tile @ x) @ W: zero redundant work under row tiling.
        m = x.astype(compute_dtype)
        w_in = weight.astype(compute_dtype)
        f_right = f_in
    else:
        # Pre-transform once (small GEMM, done in full f32 precision so it matches
        # the PyTorch f32 module); kernel then streams adj_tile @ T.
        t = jnp.dot(x, weight, precision=jax.lax.Precision.HIGHEST,
                    preferred_element_type=jnp.float32)
        m = t.astype(compute_dtype)
        w_in = None
        f_right = f_out

    bias2d = bias.reshape(1, f_out).astype(jnp.float32)
    if gamma is None:
        gamma = jnp.ones((f_out,), jnp.float32)
    if beta is None:
        beta = jnp.zeros((f_out,), jnp.float32)
    gamma2d = gamma.reshape(1, f_out).astype(jnp.float32)
    beta2d = beta.reshape(1, f_out).astype(jnp.float32)

    # ---- Row tiling of the adjacency (pipelined, bounded VMEM). ----------------
    tm = block_rows if block_rows is not None else _choose_block_rows(
        n, n, f_out, itemsize)
    tm = max(8, _round_up(int(tm), 8))
    tm = min(tm, _round_up(n, 8))
    n_pad = _round_up(n, tm)

    adj_c = adj.astype(compute_dtype)
    if n_pad > n:
        # Pad rows only; padded output rows are sliced off below.
        adj_c = jnp.pad(adj_c, ((0, n_pad - n), (0, 0)))

    grid = (n_pad // tm,)

    in_specs = [
        pl.BlockSpec((tm, n), lambda i: (i, 0)),          # adj row tile (streamed)
        pl.BlockSpec((n, f_right), lambda i: (0, 0)),     # x or x@W (resident)
    ]
    inputs = [adj_c, m]
    if apply_weight:
        in_specs.append(pl.BlockSpec((f_in, f_out), lambda i: (0, 0)))  # W (resident)
        inputs.append(w_in)
    in_specs += [
        pl.BlockSpec((1, f_out), lambda i: (0, 0)),       # bias   (resident)
        pl.BlockSpec((1, f_out), lambda i: (0, 0)),       # gamma  (resident)
        pl.BlockSpec((1, f_out), lambda i: (0, 0)),       # beta   (resident)
    ]
    inputs += [bias2d, gamma2d, beta2d]

    kernel = functools.partial(_gcn_kernel,
                               apply_weight=apply_weight,
                               use_layer_norm=layer_norm,
                               activation=activation,
                               eps=eps)

    out = pl.pallas_call(
        kernel,
        out_shape=jax.ShapeDtypeStruct((n_pad, f_out), out_dtype),
        grid_spec=pltpu.PrefetchScalarGridSpec(
            num_scalar_prefetch=0,
            grid=grid,
            in_specs=in_specs,
            out_specs=pl.BlockSpec((tm, f_out), lambda i: (i, 0)),
        ),
        compiler_params=pltpu.CompilerParams(
            # Row tiles are independent -> megacore-shardable on v7x.
            dimension_semantics=("parallel",),
            vmem_limit_bytes=32 * 1024 * 1024,
        ),
    )(*inputs)

    return out[:n] if n_pad > n else out


def xavier_uniform(key, fan_in, fan_out, dtype=jnp.float32):
    # Matches torch.nn.init.xavier_uniform_ with gain=1.
    limit = (6.0 / (fan_in + fan_out)) ** 0.5
    return jax.random.uniform(key, (fan_in, fan_out), dtype,
                              minval=-limit, maxval=limit)


if __name__ == "__main__":
    key = jax.random.PRNGKey(0)
    k_adj, k_x, k_w, k_adj2, k_x2, k_w2 = jax.random.split(key, 6)

    HI = jax.lax.Precision.HIGHEST

    # ---------------- Test 1: lane-dense shapes, default config -----------------
    n_nodes, f_in, f_out = 256, 128, 128   # features multiple of 128, nodes mult of 8

    raw = (jax.random.uniform(k_adj, (n_nodes, n_nodes)) > 0.5).astype(jnp.float32)
    raw = raw + jnp.eye(n_nodes, dtype=jnp.float32)            # self-loops
    adj = raw / jnp.sum(raw, axis=-1, keepdims=True)           # mean aggregation
    x = jax.random.normal(k_x, (n_nodes, f_in), jnp.float32)
    weight = xavier_uniform(k_w, f_in, f_out)
    bias = jnp.zeros((f_out,), jnp.float32)

    out = gcn_forward(adj, x, weight, bias, block_rows=64)     # 4-step pipelined grid
    out = jax.block_until_ready(out)

    ref = jnp.dot(adj, jnp.dot(x, weight, precision=HI), precision=HI) + bias
    assert out.shape == (n_nodes, f_out)
    assert jnp.allclose(out, ref, atol=2e-3, rtol=2e-3)

    # Optional bf16 MXU path (v6e/v7x feed the MXU bf16, f32 accumulate).
    out_bf16 = gcn_forward(adj, x, weight, bias, block_rows=64,
                           mxu_dtype=jnp.bfloat16)
    out_bf16 = jax.block_until_ready(out_bf16)
    assert jnp.allclose(out_bf16, ref, atol=5e-2, rtol=5e-2)

    # ------- Test 2: F_out < F_in (pre-transform path), ragged N, LN + relu -----
    n2, f_in2, f_out2 = 200, 256, 128      # N not a multiple of the row tile
    raw2 = (jax.random.uniform(k_adj2, (n2, n2)) > 0.5).astype(jnp.float32)
    raw2 = raw2 + jnp.eye(n2, dtype=jnp.float32)
    adj2 = raw2 / jnp.sum(raw2, axis=-1, keepdims=True)
    x2 = jax.random.normal(k_x2, (n2, f_in2), jnp.float32)
    w2 = xavier_uniform(k_w2, f_in2, f_out2)
    b2 = jnp.zeros((f_out2,), jnp.float32)

    out2 = gcn_forward(adj2, x2, w2, b2, activation="relu", layer_norm=True,
                       block_rows=64)
    out2 = jax.block_until_ready(out2)

    h = jnp.dot(adj2, jnp.dot(x2, w2, precision=HI), precision=HI) + b2
    mu = h.mean(-1, keepdims=True)
    var = ((h - mu) ** 2).mean(-1, keepdims=True)
    ref2 = jnp.maximum((h - mu) / jnp.sqrt(var + 1e-5), 0.0)
    assert out2.shape == (n2, f_out2)
    assert jnp.allclose(out2, ref2, atol=5e-3, rtol=5e-3)

    # TODO(synk): nn.Dropout with p>0 (training-mode stochastic masking) is not
    # implemented; the module default p=0 makes it Identity.
    print("KERNEL_OK")
</pallas_src>

<mosaic_0001>
module attributes {stable_mosaic.version = 11 : i64} {
  func.func @_gcn_kernel(%arg0: i32, %arg1: memref<64x256xf32, #tpu.memory_space<vmem>>, %arg2: memref<256x128xf32, #tpu.memory_space<vmem>>, %arg3: memref<128x128xf32, #tpu.memory_space<vmem>>, %arg4: memref<1x128xf32, #tpu.memory_space<vmem>>, %arg5: memref<1x128xf32, #tpu.memory_space<vmem>>, %arg6: memref<1x128xf32, #tpu.memory_space<vmem>>, %arg7: memref<64x128xf32, #tpu.memory_space<vmem>>) attributes {dimension_semantics = [#tpu.dimension_semantics<parallel>], iteration_bounds = array<i64: 4>, scalar_prefetch = 0 : i64, scratch_operands = 0 : i64, tpu.core_type = #tpu.core_type<tc>, window_params = [{transform_indices = @transform_0, window_bounds = array<i64: 64, 256>}, {pipeline_mode = #tpu.pipeline_mode<synchronous>, transform_indices = @transform_1, window_bounds = array<i64: 256, 128>}, {pipeline_mode = #tpu.pipeline_mode<synchronous>, transform_indices = @transform_2, window_bounds = array<i64: 128, 128>}, {pipeline_mode = #tpu.pipeline_mode<synchronous>, transform_indices = @transform_3, window_bounds = array<i64: 1, 128>}, {pipeline_mode = #tpu.pipeline_mode<synchronous>, transform_indices = @transform_4, window_bounds = array<i64: 1, 128>}, {pipeline_mode = #tpu.pipeline_mode<synchronous>, transform_indices = @transform_5, window_bounds = array<i64: 1, 128>}, {transform_indices = @transform_6, window_bounds = array<i64: 64, 128>}]} {
    %c0 = arith.constant 0 : index
    %c0_0 = arith.constant 0 : index
    %0 = vector.load %arg1[%c0, %c0_0] : memref<64x256xf32, #tpu.memory_space<vmem>>, vector<64x256xf32>
    %c0_1 = arith.constant 0 : index
    %c0_2 = arith.constant 0 : index
    %1 = vector.load %arg2[%c0_1, %c0_2] : memref<256x128xf32, #tpu.memory_space<vmem>>, vector<256x128xf32>
    %cst = arith.constant dense<0.000000e+00> : vector<64x128xf32>
    %2 = tpu.matmul %0, %1, %cst {dimension_numbers = #tpu.dot_dimension_numbers<[1], [0], [0], [1], [0, 0, 1, 1], [], []>} : vector<64x256xf32>, vector<256x128xf32>, vector<64x128xf32> -> vector<64x128xf32>
    %c0_3 = arith.constant 0 : index
    %c0_4 = arith.constant 0 : index
    %3 = vector.load %arg3[%c0_3, %c0_4] : memref<128x128xf32, #tpu.memory_space<vmem>>, vector<128x128xf32>
    %cst_5 = arith.constant dense<0.000000e+00> : vector<64x128xf32>
    %4 = tpu.matmul %2, %3, %cst_5 {dimension_numbers = #tpu.dot_dimension_numbers<[1], [0], [0], [1], [0, 0, 1, 1], [], []>} : vector<64x128xf32>, vector<128x128xf32>, vector<64x128xf32> -> vector<64x128xf32>
    %c0_6 = arith.constant 0 : index
    %c0_7 = arith.constant 0 : index
    %5 = vector.load %arg4[%c0_6, %c0_7] : memref<1x128xf32, #tpu.memory_space<vmem>>, vector<1x128xf32>
    %6 = vector.broadcast %5 : vector<1x128xf32> to vector<64x128xf32>
    %7 = arith.addf %4, %6 : vector<64x128xf32>
    %c0_8 = arith.constant 0 : index
    %c0_9 = arith.constant 0 : index
    %8 = vector.load %arg7[%c0_8, %c0_9] : memref<64x128xf32, #tpu.memory_space<vmem>>, vector<64x128xf32>
    tpu.vector_store %arg7[%c0_8, %c0_9], %7 {strides = array<i32>} : memref<64x128xf32, #tpu.memory_space<vmem>>, vector<64x128xf32>,
    return
  }
  func.func @transform_0(%arg0: i32) -> (i32, i32) {
    %c0_i32 = arith.constant 0 : i32
    %c0_i32_0 = arith.constant 0 : i32
    return %arg0, %c0_i32 : i32, i32
  }
  func.func @transform_1(%arg0: i32) -> (i32, i32) {
    %c0_i32 = arith.constant 0 : i32
    %c0_i32_0 = arith.constant 0 : i32
    %c0_i32_1 = arith.constant 0 : i32
    return %c0_i32, %c0_i32_0 : i32, i32
  }
  func.func @transform_2(%arg0: i32) -> (i32, i32) {
    %c0_i32 = arith.constant 0 : i32
    %c0_i32_0 = arith.constant 0 : i32
    %c0_i32_1 = arith.constant 0 : i32
    return %c0_i32, %c0_i32_0 : i32, i32
  }
  func.func @transform_3(%arg0: i32) -> (i32, i32) {
    %c0_i32 = arith.constant 0 : i32
    %c0_i32_0 = arith.constant 0 : i32
    %c0_i32_1 = arith.constant 0 : i32
    return %c0_i32, %c0_i32_0 : i32, i32
  }
  func.func @transform_4(%arg0: i32) -> (i32, i32) {
    %c0_i32 = arith.constant 0 : i32
    %c0_i32_0 = arith.constant 0 : i32
    %c0_i32_1 = arith.constant 0 : i32
    return %c0_i32, %c0_i32_0 : i32, i32
  }
  func.func @transform_5(%arg0: i32) -> (i32, i32) {
    %c0_i32 = arith.constant 0 : i32
    %c0_i32_0 = arith.constant 0 : i32
    %c0_i32_1 = arith.constant 0 : i32
    return %c0_i32, %c0_i32_0 : i32, i32
  }
  func.func @transform_6(%arg0: i32) -> (i32, i32) {
    %c0_i32 = arith.constant 0 : i32
    %c0_i32_0 = arith.constant 0 : i32
    return %arg0, %c0_i32 : i32, i32
  }
}

</mosaic_0001>

<llo_original>
// kernel: tpu_custom_call.1
$region0: #{tpu_custom_call.1}
  #allocation0 [shape = 'u32[]', space=smem, size = 0x4, offset = 0x4, fixed_abs, tag = 'smem constant byte address 0x4 - core index']
  #allocation1 [shape = 'u32[72,128]{1,0:T(1,128)}', space=vmem, size = 0x9000, scoped, tag = 'internal scratch']
  %s0 = inlined_call_operand.hbm [shape: f32[256,256], index: 0, kind: input, shape index: {}]
  %s1 = inlined_call_operand.hbm [shape: f32[256,128], index: 1, kind: input, shape index: {}]
  %s2 = inlined_call_operand.hbm [shape: f32[128,128], index: 2, kind: input, shape index: {}]
  %s3 = inlined_call_operand.vmem [shape: f32[1,128], index: 3, kind: input, shape index: {}]
  %s4 = inlined_call_operand.vmem [shape: f32[1,128], index: 4, kind: input, shape index: {}]
  %s5 = inlined_call_operand.vmem [shape: f32[1,128], index: 5, kind: input, shape index: {}]
  %s6 = inlined_call_operand.hbm [shape: f32[256,128], index: 6, kind: output, shape index: {}]
  %s7 = sld [smem:[#allocation0]]
  $region69: #{tpu_custom_call.1} parent=0
    _
  %s9 = ssub.s32 1, %s7
  %s10 = scalar_select 0, %s9, %s7
  $region1: #{tpu_custom_call.1} parent=0
    #allocation2 [shape = 'u8[131072]{0}', space=vmem, size = 0x20000, scoped, tag = 'input window, operand 0']
    #allocation3 [shape = 's32[2]{0}', space=sflag, size = 0x8, scoped, tag = 'scoped memory for tpu_custom_call.1']
    #allocation4 [shape = 's32[2]{0}', space=sflag, size = 0x8, scoped, tag = 'scoped memory for tpu_custom_call.1']
    #allocation5 [shape = 'u8[131072]{0}', space=vmem, size = 0x20000, scoped, tag = 'input window, operand 1, single buffered']
    #allocation6 [shape = 's32[1]{0}', space=sflag, size = 0x4, scoped, tag = 'scoped memory for tpu_custom_call.1']
    #allocation7 [shape = 'u8[65536]{0}', space=vmem, size = 0x10000, scoped, tag = 'input window, operand 2, single buffered']
    #allocation8 [shape = 'u8[65536]{0}', space=vmem, size = 0x10000, scoped, tag = 'output window, operand 0']
    %11 = vsyncpa [#allocation3], 0
    %s12 = scalar_lea.sflag [#allocation3], 1
    %13 = vsyncpa %s12, 0
    %14 = vsyncpa [#allocation6], 0
    %15 = vsyncpa [#allocation4], 0
    %s16 = scalar_lea.sflag [#allocation4], 1
    %17 = vsyncpa %s16, 0
    loop: start=0, step=1, limit=6
    $region2: #{tpu_custom_call.1} parent=1 // loop_pre_header
      _
    $region3: #{tpu_custom_call.1} parent=1 // loop_header
      %s19 = sphi 0, %s23
      %p20 = scmp.ge.s32.totalorder %s19, 6
      %s29 = sphi 0, %s31
      %s32 = sphi 0, %s29
      %s33 = sphi 0, %s32
      %s49 = sphi 0, %s33
      %s53 = sphi 0, %s53
      %s55 = sphi 0, %s53
      %s56 = sphi 0, %s55
      %s70 = sphi 0, %s56
      %s74 = sphi 0, %s74
      %s76 = sphi 0, %s74
      %s77 = sphi 0, %s76
      %s91 = sphi 0, %s77
      %s95 = sphi 0, %s95
      %s97 = sphi 0, %s95
      %s98 = sphi 0, %s97
      %s112 = sphi 0, %s98
      %s116 = sphi 0, %s116
      %s118 = sphi 0, %s116
      %s119 = sphi 0, %s118
      %s133 = sphi 0, %s119
      %s137 = sphi 0, %s137
      %s139 = sphi 0, %s137
      %s140 = sphi 0, %s139
      %s154 = sphi 0, %s140
      %s160 = sphi 0, %s162
      %s163 = sphi 0, %s160
      %s164 = sphi 0, %s163
      %s180 = sphi 0, %s164
    $region4: #{tpu_custom_call.1} parent=1 // loop_header_branch
      %22 = sbr.rel (%p20) target = $region8
    $region5: #{tpu_custom_call.1} parent=1 // loop_body
      %s24 = ssub.s32 %s19, 1
      %s25 = ssub.s32 %s19, 2
      %s26 = sadd.s32 %s19, 1
      %s27 = ssub.s32 %s19, %s26
      %p28 = scmp.eq.s32.totalorder %s27, 0
      %s30 = sadd.s32 %s29, 1
      %s31 = scalar_select %p28, %s29, %s30
      %p34 = pneg %p28
      %p35 = scmp.eq.s32.totalorder %s19, 3
      %p36 = por %p34, %p35
      %p37 = scmp.ne.s32.totalorder %s29, %s32
      %p38 = scmp.eq.s32.totalorder %s19, 0
      %p39 = por %p37, %p38
      %p40 = scmp.ne.s32.totalorder %s29, %s32
      %p41 = scmp.eq.s32.totalorder %s24, 3
      %p42 = por %p40, %p41
      %p43 = scmp.ne.s32.totalorder %s32, %s33
      %p44 = scmp.eq.s32.totalorder %s24, 0
      %p45 = por %p43, %p44
      %p46 = scmp.ne.s32.totalorder %s32, %s33
      %p47 = scmp.eq.s32.totalorder %s25, 3
      %p48 = por %p46, %p47
      %p50 = scmp.ne.s32.totalorder %s33, %s49
      %p51 = scmp.eq.s32.totalorder %s25, 0
      %p52 = por %p50, %p51
      %s54 = sadd.s32 %s53, 1
      %p57 = scmp.eq.s32.totalorder %s19, 3
      %p58 = scmp.ne.s32.totalorder %s53, %s55
      %p59 = scmp.eq.s32.totalorder %s19, 0
      %p60 = por %p58, %p59
      %p61 = scmp.ne.s32.totalorder %s53, %s55
      %p62 = scmp.eq.s32.totalorder %s24, 3
      %p63 = por %p61, %p62
      %p64 = scmp.ne.s32.totalorder %s55, %s56
      %p65 = scmp.eq.s32.totalorder %s24, 0
      %p66 = por %p64, %p65
      %p67 = scmp.ne.s32.totalorder %s55, %s56
      %p68 = scmp.eq.s32.totalorder %s25, 3
      %p69 = por %p67, %p68
      %p71 = scmp.ne.s32.totalorder %s56, %s70
      %p72 = scmp.eq.s32.totalorder %s25, 0
      %p73 = por %p71, %p72
      %s75 = sadd.s32 %s74, 1
      %p78 = scmp.eq.s32.totalorder %s19, 3
      %p79 = scmp.ne.s32.totalorder %s74, %s76
      %p80 = scmp.eq.s32.totalorder %s19, 0
      %p81 = por %p79, %p80
      %p82 = scmp.ne.s32.totalorder %s74, %s76
      %p83 = scmp.eq.s32.totalorder %s24, 3
      %p84 = por %p82, %p83
      %p85 = scmp.ne.s32.totalorder %s76, %s77
      %p86 = scmp.eq.s32.totalorder %s24, 0
      %p87 = por %p85, %p86
      %p88 = scmp.ne.s32.totalorder %s76, %s77
      %p89 = scmp.eq.s32.totalorder %s25, 3
      %p90 = por %p88, %p89
      %p92 = scmp.ne.s32.totalorder %s77, %s91
      %p93 = scmp.eq.s32.totalorder %s25, 0
      %p94 = por %p92, %p93
      %s96 = sadd.s32 %s95, 1
      %p99 = scmp.eq.s32.totalorder %s19, 3
      %p100 = scmp.ne.s32.totalorder %s95, %s97
      %p101 = scmp.eq.s32.totalorder %s19, 0
      %p102 = por %p100, %p101
      %p103 = scmp.ne.s32.totalorder %s95, %s97
      %p104 = scmp.eq.s32.totalorder %s24, 3
      %p105 = por %p103, %p104
      %p106 = scmp.ne.s32.totalorder %s97, %s98
      %p107 = scmp.eq.s32.totalorder %s24, 0
      %p108 = por %p106, %p107
      %p109 = scmp.ne.s32.totalorder %s97, %s98
      %p110 = scmp.eq.s32.totalorder %s25, 3
      %p111 = por %p109, %p110
      %p113 = scmp.ne.s32.totalorder %s98, %s112
      %p114 = scmp.eq.s32.totalorder %s25, 0
      %p115 = por %p113, %p114
      %s117 = sadd.s32 %s116, 1
      %p120 = scmp.eq.s32.totalorder %s19, 3
      %p121 = scmp.ne.s32.totalorder %s116, %s118
      %p122 = scmp.eq.s32.totalorder %s19, 0
      %p123 = por %p121, %p122
      %p124 = scmp.ne.s32.totalorder %s116, %s118
      %p125 = scmp.eq.s32.totalorder %s24, 3
      %p126 = por %p124, %p125
      %p127 = scmp.ne.s32.totalorder %s118, %s119
      %p128 = scmp.eq.s32.totalorder %s24, 0
      %p129 = por %p127, %p128
      %p130 = scmp.ne.s32.totalorder %s118, %s119
      %p131 = scmp.eq.s32.totalorder %s25, 3
      %p132 = por %p130, %p131
      %p134 = scmp.ne.s32.totalorder %s119, %s133
      %p135 = scmp.eq.s32.totalorder %s25, 0
      %p136 = por %p134, %p135
      %s138 = sadd.s32 %s137, 1
      %p141 = scmp.eq.s32.totalorder %s19, 3
      %p142 = scmp.ne.s32.totalorder %s137, %s139
      %p143 = scmp.eq.s32.totalorder %s19, 0
      %p144 = por %p142, %p143
      %p145 = scmp.ne.s32.totalorder %s137, %s139
      %p146 = scmp.eq.s32.totalorder %s24, 3
      %p147 = por %p145, %p146
      %p148 = scmp.ne.s32.totalorder %s139, %s140
      %p149 = scmp.eq.s32.totalorder %s24, 0
      %p150 = por %p148, %p149
      %p151 = scmp.ne.s32.totalorder %s139, %s140
      %p152 = scmp.eq.s32.totalorder %s25, 3
      %p153 = por %p151, %p152
      %p155 = scmp.ne.s32.totalorder %s140, %s154
      %p156 = scmp.eq.s32.totalorder %s25, 0
      %p157 = por %p155, %p156
      %s158 = ssub.s32 %s19, %s26
      %p159 = scmp.eq.s32.totalorder %s158, 0
      %s161 = sadd.s32 %s160, 1
      %s162 = scalar_select %p159, %s160, %s161
      %p165 = pneg %p159
      %p166 = scmp.eq.s32.totalorder %s19, 3
      %p167 = por %p165, %p166
      %p168 = scmp.ne.s32.totalorder %s160, %s163
      %p169 = scmp.eq.s32.totalorder %s19, 0
      %p170 = por %p168, %p169
      %p171 = scmp.ne.s32.totalorder %s160, %s163
      %p172 = scmp.eq.s32.totalorder %s24, 3
      %p173 = por %p171, %p172
      %p174 = scmp.ne.s32.totalorder %s163, %s164
      %p175 = scmp.eq.s32.totalorder %s24, 0
      %p176 = por %p174, %p175
      %p177 = scmp.ne.s32.totalorder %s163, %s164
      %p178 = scmp.eq.s32.totalorder %s25, 3
      %p179 = por %p177, %p178
      %p181 = scmp.ne.s32.totalorder %s164, %s180
      %p182 = scmp.eq.s32.totalorder %s25, 0
      %p183 = por %p181, %p182
      %p184 = scmp.le.s32.totalorder 1, %s19
      %p185 = scmp.lt.s32.totalorder %s19, 5
      %p186 = pnand %p184, %p185
      %p187 = pneg %p186
      // Predicated region
      $region9: #{tpu_custom_call.1} parent=5 // pred_check
        _
      $region10: #{tpu_custom_call.1} parent=5 // pred_check_branch
        %189 = sbr.rel (%p186) target = $region12
      $region11: #{tpu_custom_call.1} parent=5 // pred_region
        %s190 = ssub.s32 %s19, 1
        // Predicated region
        $region13: #{tpu_custom_call.1} parent=11 // pred_check
          %p191 = pneg %p66
        $region14: #{tpu_custom_call.1} parent=11 // pred_check_branch
          %193 = sbr.rel (%p191) target = $region16
        $region15: #{tpu_custom_call.1} parent=11 // pred_region
          %195 = vsyncadd [#allocation6], 0
          %s196 = sshll.u32 %s1, 4
          %s197 = int_to_ptr.hbm [resolvable:$true] %s196
          %s198 = sshll.u32 [#allocation5], 4
          %s199 = int_to_ptr.vmem [resolvable:$true] %s198
          %204 = dma.hbm_to_vmem [thread:$0]  %s197, 4096, %s199, [#allocation6], 128, 128, 8
        $region16: #{tpu_custom_call.1} parent=11 // pred_fallthru
          _
        // Predicated region
        $region17: #{tpu_custom_call.1} parent=11 // pred_check
          %p205 = pneg %p87
        $region18: #{tpu_custom_call.1} parent=11 // pred_check_branch
          %207 = sbr.rel (%p205) target = $region20
        $region19: #{tpu_custom_call.1} parent=11 // pred_region
          %209 = vsyncadd [#allocation6], 0
          %s210 = sshll.u32 %s2, 4
          %s211 = int_to_ptr.hbm [resolvable:$true] %s210
          %s212 = sshll.u32 [#allocation7], 4
          %s213 = int_to_ptr.vmem [resolvable:$true] %s212
          %218 = dma.hbm_to_vmem [thread:$0]  %s211, 2048, %s213, [#allocation6], 128, 128, 8
        $region20: #{tpu_custom_call.1} parent=11 // pred_fallthru
          _
        // Predicated region
        $region21: #{tpu_custom_call.1} parent=11 // pred_check
          %p219 = pneg %p108
        $region22: #{tpu_custom_call.1} parent=11 // pred_check_branch
          %221 = sbr.rel (%p219) target = $region24
        $region23: #{tpu_custom_call.1} parent=11 // pred_region
          _
        $region24: #{tpu_custom_call.1} parent=11 // pred_fallthru
          _
        // Predicated region
        $region25: #{tpu_custom_call.1} parent=11 // pred_check
          %p222 = pneg %p129
        $region26: #{tpu_custom_call.1} parent=11 // pred_check_branch
          %224 = sbr.rel (%p222) target = $region28
        $region27: #{tpu_custom_call.1} parent=11 // pred_region
          _
        $region28: #{tpu_custom_call.1} parent=11 // pred_fallthru
          _
        // Predicated region
        $region29: #{tpu_custom_call.1} parent=11 // pred_check
          %p225 = pneg %p150
        $region30: #{tpu_custom_call.1} parent=11 // pred_check_branch
          %227 = sbr.rel (%p225) target = $region32
        $region31: #{tpu_custom_call.1} parent=11 // pred_region
          _
        $region32: #{tpu_custom_call.1} parent=11 // pred_fallthru
          _
      $region12: #{tpu_custom_call.1} parent=5 // pred_fallthru
        _
      %p228 = scmp.lt.s32.totalorder %s19, 4
      // Predicated region
      $region33: #{tpu_custom_call.1} parent=5 // pred_check
        %p229 = pneg %p228
      $region34: #{tpu_custom_call.1} parent=5 // pred_check_branch
        %231 = sbr.rel (%p229) target = $region36
      $region35: #{tpu_custom_call.1} parent=5 // pred_region
        // Predicated region
        $region37: #{tpu_custom_call.1} parent=35 // pred_check
          %p232 = pneg %p39
        $region38: #{tpu_custom_call.1} parent=35 // pred_check_branch
          %234 = sbr.rel (%p232) target = $region40
        $region39: #{tpu_custom_call.1} parent=35 // pred_region
          %s235 = sand.u32 %s29, 1
          %s236 = scalar_lea.sflag [#allocation3], %s235
          %s237 = sand.u32 %s29, 1
          %s238 = smul.addr %s237, 128
          %s239 = scalar_lea.vmem [#allocation2], %s238
          %s240 = smul.u32 8, %s19
          %242 = vsyncadd %s236, 0
          %s243 = smul.addr %s240, 2
          %s244 = smul.addr %s243, 8
          %s245 = scalar_lea.hbm %s0, %s244
          %s246 = sshll.u32 %s245, 4
          %s247 = int_to_ptr.hbm [resolvable:$true] %s246
          %s248 = sshll.u32 %s239, 4
          %s249 = int_to_ptr.vmem [resolvable:$true] %s248
          %254 = dma.hbm_to_vmem [thread:$0]  %s247, 2048, %s249, %s236, 256, 256, 16
        $region40: #{tpu_custom_call.1} parent=35 // pred_fallthru
          _
      $region36: #{tpu_custom_call.1} parent=5 // pred_fallthru
        _
      %p255 = scmp.le.s32.totalorder 1, %s19
      %p256 = scmp.lt.s32.totalorder %s19, 5
      %p257 = pnand %p255, %p256
      %p258 = pneg %p257
      // Predicated region
      $region41: #{tpu_custom_call.1} parent=5 // pred_check
        _
      $region42: #{tpu_custom_call.1} parent=5 // pred_check_branch
        %260 = sbr.rel (%p257) target = $region44
      $region43: #{tpu_custom_call.1} parent=5 // pred_region
        %s261 = ssub.s32 %s19, 1
        %s262 = sand.u32 %s32, 1
        %s263 = scalar_lea.sflag [#allocation3], %s262
        %s264 = sand.u32 %s32, 1
        %s265 = smul.addr %s264, 128
        %s266 = scalar_lea.vmem [#allocation2], %s265
        // Predicated region
        $region45: #{tpu_custom_call.1} parent=43 // pred_check
          %p267 = pneg %p45
        $region46: #{tpu_custom_call.1} parent=43 // pred_check_branch
          %269 = sbr.rel (%p267) target = $region48
        $region47: #{tpu_custom_call.1} parent=43 // pred_region
          %271 = dma.done %s263, 2048
        $region48: #{tpu_custom_call.1} parent=43 // pred_fallthru
          _
        // Predicated region
        $region49: #{tpu_custom_call.1} parent=43 // pred_check
          %p272 = pneg %p66
        $region50: #{tpu_custom_call.1} parent=43 // pred_check_branch
          %274 = sbr.rel (%p272) target = $region52
        $region51: #{tpu_custom_call.1} parent=43 // pred_region
          %276 = dma.done [#allocation6], 4096
        $region52: #{tpu_custom_call.1} parent=43 // pred_fallthru
          _
        // Predicated region
        $region53: #{tpu_custom_call.1} parent=43 // pred_check
          %p277 = pneg %p87
        $region54: #{tpu_custom_call.1} parent=43 // pred_check_branch
          %279 = sbr.rel (%p277) target = $region56
        $region55: #{tpu_custom_call.1} parent=43 // pred_region
          %281 = dma.done [#allocation6], 2048
        $region56: #{tpu_custom_call.1} parent=43 // pred_fallthru
          _
        %s282 = sand.u32 %s32, 1
        %s283 = scalar_lea.sflag [#allocation3], %s282
        %s284 = sand.u32 %s32, 1
        %s285 = smul.addr %s284, 128
        %s286 = scalar_lea.vmem [#allocation2], %s285
        %p287 = pneg %p45
        %p288 = pneg %p42
        %p289 = pneg %p66
        %p290 = pneg %p63
        %p291 = pneg %p87
        %p292 = pneg %p84
        %p293 = pneg %p108
        %p294 = pneg %p105
        %p295 = pneg %p129
        %p296 = pneg %p126
        %p297 = pneg %p150
        %p298 = pneg %p147
        %p299 = pneg %p176
        %p300 = pneg %p173
        %s301 = sand.u32 %s163, 1
        %s302 = scalar_lea.sflag [#allocation4], %s301
        %s303 = sand.u32 %s163, 1
        %s304 = smul.addr %s303, 64
        %s305 = scalar_lea.vmem [#allocation8], %s304
        %s306 = smul.u32 8, %s24
        %s307 = smul.u32 8, %s24
        %v308 = vld [vmem:[%s266] sm:$0xff]
        %v309 = vld [vmem:[%s266 + $0x8] sm:$0xff]
        %v310 = vld [vmem:[%s266 + $0x10] sm:$0xff]
        %v311 = vld [vmem:[%s266 + $0x18] sm:$0xff]
        %v312 = vld [vmem:[%s266 + $0x20] sm:$0xff]
        %v313 = vld [vmem:[%s266 + $0x28] sm:$0xff]
        %v314 = vld [vmem:[%s266 + $0x30] sm:$0xff]
        %v315 = vld [vmem:[%s266 + $0x38] sm:$0xff]
        %v316 = vld [vmem:[%s266 + $0x40] sm:$0xff]
        %v317 = vld [vmem:[%s266 + $0x48] sm:$0xff]
        %v318 = vld [vmem:[%s266 + $0x50] sm:$0xff]
        %v319 = vld [vmem:[%s266 + $0x58] sm:$0xff]
        %v320 = vld [vmem:[%s266 + $0x60] sm:$0xff]
        %v321 = vld [vmem:[%s266 + $0x68] sm:$0xff]
        %v322 = vld [vmem:[%s266 + $0x70] sm:$0xff]
        %v323 = vld [vmem:[%s266 + $0x78] sm:$0xff]
        %v324 = vld [vmem:[#allocation5] sm:$0xff]
        %v325 = vld [vmem:[#allocation5 + $0x8] sm:$0xff]
        %v326 = vld [vmem:[#allocation5 + $0x10] sm:$0xff]
        %v327 = vld [vmem:[#allocation5 + $0x18] sm:$0xff]
        %v328 = vld [vmem:[#allocation5 + $0x20] sm:$0xff]
        %v329 = vld [vmem:[#allocation5 + $0x28] sm:$0xff]
        %v330 = vld [vmem:[#allocation5 + $0x30] sm:$0xff]
        %v331 = vld [vmem:[#allocation5 + $0x38] sm:$0xff]
        %v332 = vld [vmem:[#allocation5 + $0x40] sm:$0xff]
        %v333 = vld [vmem:[#allocation5 + $0x48] sm:$0xff]
        %v334 = vld [vmem:[#allocation5 + $0x50] sm:$0xff]
        %v335 = vld [vmem:[#allocation5 + $0x58] sm:$0xff]
        %v336 = vld [vmem:[#allocation5 + $0x60] sm:$0xff]
        %v337 = vld [vmem:[#allocation5 + $0x68] sm:$0xff]
        %v338 = vld [vmem:[#allocation5 + $0x70] sm:$0xff]
        %v339 = vld [vmem:[#allocation5 + $0x78] sm:$0xff]
        %v340 = vld [vmem:[#allocation5 + $0x80] sm:$0xff]
        %v341 = vld [vmem:[#allocation5 + $0x88] sm:$0xff]
        %v342 = vld [vmem:[#allocation5 + $0x90] sm:$0xff]
        %v343 = vld [vmem:[#allocation5 + $0x98] sm:$0xff]
        %v344 = vld [vmem:[#allocation5 + $0xa0] sm:$0xff]
        %v345 = vld [vmem:[#allocation5 + $0xa8] sm:$0xff]
        %v346 = vld [vmem:[#allocation5 + $0xb0] sm:$0xff]
        %v347 = vld [vmem:[#allocation5 + $0xb8] sm:$0xff]
        %v348 = vld [vmem:[#allocation5 + $0xc0] sm:$0xff]
        %v349 = vld [vmem:[#allocation5 + $0xc8] sm:$0xff]
        %v350 = vld [vmem:[#allocation5 + $0xd0] sm:$0xff]
        %v351 = vld [vmem:[#allocation5 + $0xd8] sm:$0xff]
        %v352 = vld [vmem:[#allocation5 + $0xe0] sm:$0xff]
        %v353 = vld [vmem:[#allocation5 + $0xe8] sm:$0xff]
        %v354 = vld [vmem:[#allocation5 + $0xf0] sm:$0xff]
        %v355 = vld [vmem:[#allocation5 + $0xf8] sm:$0xff]
        %356 = vmatpush.msra.mxu0 %v339
        %357 = vmatpush.msra.mxu0 %v338
        %358 = vmatpush.msra.mxu0 %v337
        %359 = vmatpush.msra.mxu0 %v336
        %360 = vmatpush.msra.mxu0 %v335
        %361 = vmatpush.msra.mxu0 %v334
        %362 = vmatpush.msra.mxu0 %v333
        %363 = vmatpush.msra.mxu0 %v332
        %364 = vmatpush.msra.mxu0 %v331
        %365 = vmatpush.msra.mxu0 %v330
        %366 = vmatpush.msra.mxu0 %v329
        %367 = vmatpush.msra.mxu0 %v328
        %368 = vmatpush.msra.mxu0 %v327
        %369 = vmatpush.msra.mxu0 %v326
        %370 = vmatpush.msra.mxu0 %v325
        %371 = vmatpush.msra.mxu0 %v324
        %372 = vmatmul.f32.gmra.mxu0 %v308
        %v373 = vpop.f32.mrf.mxu0
        %v374 = vadd.f32 0.0, %v373
        %375 = vmatmul.f32.gmra.mxu0 %v310
        %v376 = vpop.f32.mrf.mxu0
        %v377 = vadd.f32 0.0, %v376
        %378 = vmatmul.f32.gmra.mxu0 %v312
        %v379 = vpop.f32.mrf.mxu0
        %v380 = vadd.f32 0.0, %v379
        %381 = vmatmul.f32.gmra.mxu0 %v314
        %v382 = vpop.f32.mrf.mxu0
        %v383 = vadd.f32 0.0, %v382
        %384 = vmatmul.f32.gmra.mxu0 %v316
        %v385 = vpop.f32.mrf.mxu0
        %v386 = vadd.f32 0.0, %v385
        %387 = vmatmul.f32.gmra.mxu0 %v318
        %v388 = vpop.f32.mrf.mxu0
        %v389 = vadd.f32 0.0, %v388
        %390 = vmatmul.f32.gmra.mxu0 %v320
        %v391 = vpop.f32.mrf.mxu0
        %v392 = vadd.f32 0.0, %v391
        %393 = vmatmul.f32.gmra.mxu0 %v322
        %v394 = vpop.f32.mrf.mxu0
        %v395 = vadd.f32 0.0, %v394
        %396 = vdwg.mxu0
        %397 = vmatpush.msra.mxu0 %v355
        %398 = vmatpush.msra.mxu0 %v354
        %399 = vmatpush.msra.mxu0 %v353
        %400 = vmatpush.msra.mxu0 %v352
        %401 = vmatpush.msra.mxu0 %v351
        %402 = vmatpush.msra.mxu0 %v350
        %403 = vmatpush.msra.mxu0 %v349
        %404 = vmatpush.msra.mxu0 %v348
        %405 = vmatpush.msra.mxu0 %v347
        %406 = vmatpush.msra.mxu0 %v346
        %407 = vmatpush.msra.mxu0 %v345
        %408 = vmatpush.msra.mxu0 %v344
        %409 = vmatpush.msra.mxu0 %v343
        %410 = vmatpush.msra.mxu0 %v342
        %411 = vmatpush.msra.mxu0 %v341
        %412 = vmatpush.msra.mxu0 %v340
        %413 = vmatmul.f32.gmra.mxu0 %v309
        %v414 = vpop.f32.mrf.mxu0
        %v415 = vadd.f32 %v374, %v414
        %416 = vmatmul.f32.gmra.mxu0 %v311
        %v417 = vpop.f32.mrf.mxu0
        %v418 = vadd.f32 %v377, %v417
        %419 = vmatmul.f32.gmra.mxu0 %v313
        %v420 = vpop.f32.mrf.mxu0
        %v421 = vadd.f32 %v380, %v420
        %422 = vmatmul.f32.gmra.mxu0 %v315
        %v423 = vpop.f32.mrf.mxu0
        %v424 = vadd.f32 %v383, %v423
        %425 = vmatmul.f32.gmra.mxu0 %v317
        %v426 = vpop.f32.mrf.mxu0
        %v427 = vadd.f32 %v386, %v426
        %428 = vmatmul.f32.gmra.mxu0 %v319
        %v429 = vpop.f32.mrf.mxu0
        %v430 = vadd.f32 %v389, %v429
        %431 = vmatmul.f32.gmra.mxu0 %v321
        %v432 = vpop.f32.mrf.mxu0
        %v433 = vadd.f32 %v392, %v432
        %434 = vmatmul.f32.gmra.mxu0 %v323
        %v435 = vpop.f32.mrf.mxu0
        %v436 = vadd.f32 %v395, %v435
        %437 = vdwg.mxu0
        %v438 = vld [vmem:[#allocation7] sm:$0xff]
        %v439 = vld [vmem:[#allocation7 + $0x8] sm:$0xff]
        %v440 = vld [vmem:[#allocation7 + $0x10] sm:$0xff]
        %v441 = vld [vmem:[#allocation7 + $0x18] sm:$0xff]
        %v442 = vld [vmem:[#allocation7 + $0x20] sm:$0xff]
        %v443 = vld [vmem:[#allocation7 + $0x28] sm:$0xff]
        %v444 = vld [vmem:[#allocation7 + $0x30] sm:$0xff]
        %v445 = vld [vmem:[#allocation7 + $0x38] sm:$0xff]
        %v446 = vld [vmem:[#allocation7 + $0x40] sm:$0xff]
        %v447 = vld [vmem:[#allocation7 + $0x48] sm:$0xff]
        %v448 = vld [vmem:[#allocation7 + $0x50] sm:$0xff]
        %v449 = vld [vmem:[#allocation7 + $0x58] sm:$0xff]
        %v450 = vld [vmem:[#allocation7 + $0x60] sm:$0xff]
        %v451 = vld [vmem:[#allocation7 + $0x68] sm:$0xff]
        %v452 = vld [vmem:[#allocation7 + $0x70] sm:$0xff]
        %v453 = vld [vmem:[#allocation7 + $0x78] sm:$0xff]
        %v454 = vld [vmem:[%s3] sm:$0x1]
        %v456 = vperm.slane %v454, 0
        %458 = vmatpush.msra.mxu0 %v453
        %459 = vmatpush.msra.mxu0 %v452
        %460 = vmatpush.msra.mxu0 %v451
        %461 = vmatpush.msra.mxu0 %v450
        %462 = vmatpush.msra.mxu0 %v449
        %463 = vmatpush.msra.mxu0 %v448
        %464 = vmatpush.msra.mxu0 %v447
        %465 = vmatpush.msra.mxu0 %v446
        %466 = vmatpush.msra.mxu0 %v445
        %467 = vmatpush.msra.mxu0 %v444
        %468 = vmatpush.msra.mxu0 %v443
        %469 = vmatpush.msra.mxu0 %v442
        %470 = vmatpush.msra.mxu0 %v441
        %471 = vmatpush.msra.mxu0 %v440
        %472 = vmatpush.msra.mxu0 %v439
        %473 = vmatpush.msra.mxu0 %v438
        %474 = vmatmul.f32.gmra.mxu0 %v415
        %v475 = vpop.f32.mrf.mxu0
        %v476 = vadd.f32 %v456, %v475
        %477 = vmatmul.f32.gmra.mxu0 %v418
        %v478 = vpop.f32.mrf.mxu0
        %v479 = vadd.f32 %v456, %v478
        %480 = vmatmul.f32.gmra.mxu0 %v421
        %v481 = vpop.f32.mrf.mxu0
        %v482 = vadd.f32 %v456, %v481
        %483 = vmatmul.f32.gmra.mxu0 %v424
        %v484 = vpop.f32.mrf.mxu0
        %v485 = vadd.f32 %v456, %v484
        %486 = vmatmul.f32.gmra.mxu0 %v427
        %v487 = vpop.f32.mrf.mxu0
        %v488 = vadd.f32 %v456, %v487
        %489 = vmatmul.f32.gmra.mxu0 %v430
        %v490 = vpop.f32.mrf.mxu0
        %v491 = vadd.f32 %v456, %v490
        %492 = vmatmul.f32.gmra.mxu0 %v433
        %v493 = vpop.f32.mrf.mxu0
        %v494 = vadd.f32 %v456, %v493
        %495 = vmatmul.f32.gmra.mxu0 %v436
        %v496 = vpop.f32.mrf.mxu0
        %v497 = vadd.f32 %v456, %v496
        %498 = vdwg.mxu0
        %499 = vst [vmem:[%s305] sm:$0xff] %v476
        %500 = vst [vmem:[%s305 + $0x8] sm:$0xff] %v479
        %501 = vst [vmem:[%s305 + $0x10] sm:$0xff] %v482
        %502 = vst [vmem:[%s305 + $0x18] sm:$0xff] %v485
        %503 = vst [vmem:[%s305 + $0x20] sm:$0xff] %v488
        %504 = vst [vmem:[%s305 + $0x28] sm:$0xff] %v491
        %505 = vst [vmem:[%s305 + $0x30] sm:$0xff] %v494
        %506 = vst [vmem:[%s305 + $0x38] sm:$0xff] %v497
        %s507 = sand.u32 %s163, 1
        %s508 = scalar_lea.sflag [#allocation4], %s507
        %s509 = sand.u32 %s163, 1
        %s510 = smul.addr %s509, 64
        %s511 = scalar_lea.vmem [#allocation8], %s510
        // Predicated region
        $region57: #{tpu_custom_call.1} parent=43 // pred_check
          %p512 = pneg %p173
        $region58: #{tpu_custom_call.1} parent=43 // pred_check_branch
          %514 = sbr.rel (%p512) target = $region60
        $region59: #{tpu_custom_call.1} parent=43 // pred_region
          %s515 = smul.u32 8, %s24
          %517 = vsyncadd %s508, 0
          %s518 = smul.addr %s515, 8
          %s519 = scalar_lea.hbm %s6, %s518
          %s520 = sshll.u32 %s511, 4
          %s521 = int_to_ptr.vmem [resolvable:$true] %s520
          %s522 = sshll.u32 %s519, 4
          %s523 = int_to_ptr.hbm [resolvable:$true] %s522
          %528 = dma.vmem_to_hbm [thread:$0]  %s521, 1024, %s523, %s508, 128, 128, 8
        $region60: #{tpu_custom_call.1} parent=43 // pred_fallthru
          _
      $region44: #{tpu_custom_call.1} parent=5 // pred_fallthru
        _
      %p529 = scmp.le.s32.totalorder 2, %s19
      // Predicated region
      $region61: #{tpu_custom_call.1} parent=5 // pred_check
        %p530 = pneg %p529
      $region62: #{tpu_custom_call.1} parent=5 // pred_check_branch
        %532 = sbr.rel (%p530) target = $region64
      $region63: #{tpu_custom_call.1} parent=5 // pred_region
        %s533 = ssub.s32 %s19, 2
        // Predicated region
        $region65: #{tpu_custom_call.1} parent=63 // pred_check
          %p534 = pneg %p179
        $region66: #{tpu_custom_call.1} parent=63 // pred_check_branch
          %536 = sbr.rel (%p534) target = $region68
        $region67: #{tpu_custom_call.1} parent=63 // pred_region
          %s537 = sand.u32 %s164, 1
          %s538 = scalar_lea.sflag [#allocation4], %s537
          %s539 = sand.u32 %s164, 1
          %s540 = smul.addr %s539, 64
          %s541 = scalar_lea.vmem [#allocation8], %s540
          %543 = dma.done %s538, 1024
        $region68: #{tpu_custom_call.1} parent=63 // pred_fallthru
          _
      $region64: #{tpu_custom_call.1} parent=5 // pred_fallthru
        _
    $region6: #{tpu_custom_call.1} parent=1 // loop_footer
      %s23 = sadd.s32 1, %s19
    $region7: #{tpu_custom_call.1} parent=1 // loop_footer_branch
      %18 = sbr.rel target = $region3
    $region8: #{tpu_custom_call.1} parent=1 // loop_exit
      _
    %544 = vsyncpa [#allocation3], 1
    %s545 = scalar_lea.sflag [#allocation3], 1
    %546 = vsyncpa %s545, 1
    %547 = vsyncpa [#allocation6], 1
    %548 = vsyncpa [#allocation4], 1
    %s549 = scalar_lea.sflag [#allocation4], 1
    %550 = vsyncpa %s549, 1

</llo_original>
